<compile_context>
chip_gen: v7x
topology: tpu7x:2x2x1
jax: 0.10.0
libtpu: 0.0.40
codegen_flags: <defaults>
</compile_context>

<pallas_src>
import jax
import jax.numpy as jnp
from jax.experimental import pallas as pl
from jax.experimental.pallas import tpu as pltpu


def _round_up(n, m):
    return ((n + m - 1) // m) * m


def _mlp_kernel(x_ref, w1_ref, w234_ref, w4_ref, b123_ref, b4_ref, out_ref):
    """Fused mean_net + sigma_net forward for one batch tile.

    Layers 1..3 run on a block-diagonal fused width (mean block | sigma block), layer 4
    projects straight to the compact 8-wide output (mean pre-tanh cols 0:3, sigma
    pre-exp cols 3:6).  Matmuls use the weight dtype (bf16 by default) with f32
    accumulation; bias/ReLU epilogues and the final matmul are pure f32.
    """
    x = x_ref[...]                       # (bb, in_dim), bf16 or f32
    b = b123_ref[...]                    # (3, fused), f32

    # Layer 1: both nets read the same x.
    h = jnp.dot(x, w1_ref[...], preferred_element_type=jnp.float32) + b[0:1, :]
    h = jnp.maximum(h, 0.0)

    # Layers 2..3: block-diagonal fused matmuls.
    h = jnp.dot(h.astype(w234_ref.dtype), w234_ref[0],
                preferred_element_type=jnp.float32) + b[1:2, :]
    h = jnp.maximum(h, 0.0)
    h = jnp.dot(h.astype(w234_ref.dtype), w234_ref[1],
                preferred_element_type=jnp.float32) + b[2:3, :]
    h = jnp.maximum(h, 0.0)

    # Layer 4: f32 weights, compact 8-wide pre-activation output (no transcendentals).
    pre = jnp.dot(h, w4_ref[...], preferred_element_type=jnp.float32) + b4_ref[...]
    out_ref[...] = pre.astype(out_ref.dtype)


def pack_params(params, in_dim, hidden_dim, out_dim, *, dtype=jnp.bfloat16):
    """Pack the 8 Linear layers of mean_net / sigma_net into fused, padded slabs.

    Fused width F = 2*half (half >= max(hidden, out), F multiple of 128):
      columns [0:half)  -> mean_net path,  columns [half:F) -> sigma_net path.
    Layer 4 is packed separately as a (F, 8) matrix: mean rows -> cols 0:3,
    sigma rows -> cols 3:6 (row blocks are disjoint, so the math is exact).
    Padded rows/columns are zero, so fused matmuls reproduce the unfused math exactly.
    W1/W2/W3 are cast to `dtype` (bf16 by default); W4 and all biases stay f32.
    """
    half = _round_up(max(hidden_dim, out_dim), 64)
    fused = 2 * half

    wm, bm = params["mean"]["w"], params["mean"]["b"]
    ws, bs = params["sigma"]["w"], params["sigma"]["b"]
    dims_in = [in_dim, hidden_dim, hidden_dim, out_dim]
    dims_out = [hidden_dim, hidden_dim, out_dim, 3]

    # Layers 1..3: fused block-diagonal weights + fused biases.
    w_fused, b_fused = [], []
    for li in range(3):
        rin = in_dim if li == 0 else fused
        wf = jnp.zeros((rin, fused), jnp.float32)
        if li == 0:
            wf = wf.at[:, 0:dims_out[li]].set(wm[li])
            wf = wf.at[:, half:half + dims_out[li]].set(ws[li])
        else:
            wf = wf.at[0:dims_in[li], 0:dims_out[li]].set(wm[li])
            wf = wf.at[half:half + dims_in[li], half:half + dims_out[li]].set(ws[li])
        bf = jnp.zeros((fused,), jnp.float32)
        bf = bf.at[0:dims_out[li]].set(bm[li])
        bf = bf.at[half:half + dims_out[li]].set(bs[li])
        w_fused.append(wf)
        b_fused.append(bf)

    # Layer 4: compact (fused, 8) projection; stays f32 (cheap, protects exp(sigma)).
    w4 = jnp.zeros((fused, 8), jnp.float32)
    w4 = w4.at[0:out_dim, 0:3].set(wm[3])
    w4 = w4.at[half:half + out_dim, 3:6].set(ws[3])
    b4 = jnp.zeros((1, 8), jnp.float32)
    b4 = b4.at[0, 0:3].set(bm[3])
    b4 = b4.at[0, 3:6].set(bs[3])

    return {
        "w1": w_fused[0].astype(dtype),                 # (in_dim, fused)
        "w234": jnp.stack(w_fused[1:3]).astype(dtype),  # (2, fused, fused)
        "w4": w4,                                       # (fused, 8), f32
        "b123": jnp.stack(b_fused),                     # (3, fused), f32
        "b4": b4,                                       # (1, 8), f32
        "half": half,
        "fused": fused,
    }


def mlp_forward(x, packed, *, block_b=2048):
    """Run the fused MLP kernel. Returns (mean, sigma), each (batch, 3) f32."""
    w1, w234, w4 = packed["w1"], packed["w234"], packed["w4"]
    b123, b4 = packed["b123"], packed["b4"]
    fused = packed["fused"]
    batch, in_dim = x.shape

    x = x.astype(w1.dtype)  # bf16 path: cast x once in the wrapper (halves the x read)

    # Batch tile: multiple of 8 sublanes, capped at ceil(batch/2) so a mid-sized batch
    # still produces >=2 grid steps (keeps both v7x TensorCores busy). Pad batch to a
    # multiple of the tile. VMEM at bb=2048 is only a few MB, safe on every generation;
    # add pltpu.CompilerParams(vmem_limit_bytes=...) only if block_b goes past ~8K rows.
    bb = max(8, min(block_b, _round_up(pl.cdiv(batch, 2), 8)))
    padded_batch = _round_up(batch, bb)
    if padded_batch != batch:
        x = jnp.pad(x, ((0, padded_batch - batch), (0, 0)))

    out = pl.pallas_call(
        _mlp_kernel,
        out_shape=jax.ShapeDtypeStruct((padded_batch, 8), jnp.float32),
        grid_spec=pltpu.PrefetchScalarGridSpec(
            num_scalar_prefetch=0,
            grid=(padded_batch // bb,),
            in_specs=[
                pl.BlockSpec((bb, in_dim), lambda i: (i, 0)),          # x: tiled on batch
                pl.BlockSpec((in_dim, fused), lambda i: (0, 0)),       # W1: VMEM-resident
                pl.BlockSpec((2, fused, fused), lambda i: (0, 0, 0)),  # W2..W3: resident
                pl.BlockSpec((fused, 8), lambda i: (0, 0)),            # W4 (f32): resident
                pl.BlockSpec((3, fused), lambda i: (0, 0)),            # biases 1..3
                pl.BlockSpec((1, 8), lambda i: (0, 0)),                # bias 4
            ],
            out_specs=pl.BlockSpec((bb, 8), lambda i: (i, 0)),         # compact output
        ),
        compiler_params=pltpu.CompilerParams(
            dimension_semantics=("parallel",),   # v7x: both TensorCores split batch
        ),
    )(x, w1, w234, w4, b123, b4)

    # Tiny, contiguous post-kernel slice + activations (6 real columns total).
    pre = out[:batch]
    mean = jnp.tanh(pre[:, 0:3])
    sigma = jnp.exp(pre[:, 3:6])
    return mean, sigma


def init_params(key, in_dim, hidden_dim, out_dim):
    """Deterministic synthetic init matching nn.Linear shapes (W stored as (in, out))."""
    dims = [(in_dim, hidden_dim), (hidden_dim, hidden_dim), (hidden_dim, out_dim), (out_dim, 3)]
    params = {}
    for net in ("mean", "sigma"):
        ws, bs = [], []
        for (din, dout) in dims:
            key, kw, kb = jax.random.split(key, 3)
            bound = 1.0 / jnp.sqrt(din)
            ws.append(jax.random.uniform(kw, (din, dout), jnp.float32, -bound, bound))
            bs.append(jax.random.uniform(kb, (dout,), jnp.float32, -bound, bound))
        params[net] = {"w": ws, "b": bs}
    return params


def reference_forward(x, params):
    def run(net, final):
        h = x
        for i, (w, b) in enumerate(zip(params[net]["w"], params[net]["b"])):
            h = h @ w + b
            if i < 3:
                h = jnp.maximum(h, 0.0)
        return final(h)
    return run("mean", jnp.tanh), run("sigma", jnp.exp)


if __name__ == "__main__":
    in_dim, hidden_dim, out_dim = 16, 32, 8

    key = jax.random.PRNGKey(0)
    key, kx = jax.random.split(key)
    params = init_params(key, in_dim, hidden_dim, out_dim)

    # 1) f32 packing, small batch (single grid step): exact parity with the reference.
    packed_f32 = pack_params(params, in_dim, hidden_dim, out_dim, dtype=jnp.float32)
    x_small = jax.random.normal(kx, (8, in_dim), jnp.float32)
    mean, sigma = mlp_forward(x_small, packed_f32)
    jax.block_until_ready((mean, sigma))
    mean_ref, sigma_ref = reference_forward(x_small, params)
    assert jnp.allclose(mean, mean_ref, atol=1e-5, rtol=1e-5)
    assert jnp.allclose(sigma, sigma_ref, atol=1e-4, rtol=1e-4)

    # 2) f32 packing, larger non-multiple batch: exercises the >=2-step parallel grid
    #    + batch padding path.
    key, kx2 = jax.random.split(key)
    x_big = jax.random.normal(kx2, (1000, in_dim), jnp.float32)
    mean_b, sigma_b = mlp_forward(x_big, packed_f32)
    jax.block_until_ready((mean_b, sigma_b))
    mean_bref, sigma_bref = reference_forward(x_big, params)
    assert jnp.allclose(mean_b, mean_bref, atol=1e-5, rtol=1e-5)
    assert jnp.allclose(sigma_b, sigma_bref, atol=1e-4, rtol=1e-4)

    # 3) Default (bf16) packing: bf16 MXU inputs for layers 1..3, f32 accumulate,
    #    f32 final layer -> modest tolerance.
    packed_bf16 = pack_params(params, in_dim, hidden_dim, out_dim)
    mean_h, sigma_h = mlp_forward(x_big, packed_bf16)
    jax.block_until_ready((mean_h, sigma_h))
    assert jnp.allclose(mean_h, mean_bref, atol=5e-2, rtol=5e-2)
    assert jnp.allclose(sigma_h, sigma_bref, atol=5e-2, rtol=5e-2)

    print("KERNEL_OK")
</pallas_src>

<mosaic_0001>
module attributes {stable_mosaic.version = 11 : i64} {
  func.func @_mlp_kernel(%arg0: i32, %arg1: memref<8x16xf32, #tpu.memory_space<vmem>>, %arg2: memref<16x128xf32, #tpu.memory_space<vmem>>, %arg3: memref<2x128x128xf32, #tpu.memory_space<vmem>>, %arg4: memref<128x8xf32, #tpu.memory_space<vmem>>, %arg5: memref<3x128xf32, #tpu.memory_space<vmem>>, %arg6: memref<1x8xf32, #tpu.memory_space<vmem>>, %arg7: memref<8x8xf32, #tpu.memory_space<vmem>>) attributes {dimension_semantics = [#tpu.dimension_semantics<parallel>], iteration_bounds = array<i64: 1>, scalar_prefetch = 0 : i64, scratch_operands = 0 : i64, tpu.core_type = #tpu.core_type<tc>, window_params = [{transform_indices = @transform_0, window_bounds = array<i64: 8, 16>}, {pipeline_mode = #tpu.pipeline_mode<synchronous>, transform_indices = @transform_1, window_bounds = array<i64: 16, 128>}, {pipeline_mode = #tpu.pipeline_mode<synchronous>, transform_indices = @transform_2, window_bounds = array<i64: 2, 128, 128>}, {pipeline_mode = #tpu.pipeline_mode<synchronous>, transform_indices = @transform_3, window_bounds = array<i64: 128, 8>}, {pipeline_mode = #tpu.pipeline_mode<synchronous>, transform_indices = @transform_4, window_bounds = array<i64: 3, 128>}, {pipeline_mode = #tpu.pipeline_mode<synchronous>, transform_indices = @transform_5, window_bounds = array<i64: 1, 8>}, {transform_indices = @transform_6, window_bounds = array<i64: 8, 8>}]} {
    %c0 = arith.constant 0 : index
    %c0_0 = arith.constant 0 : index
    %0 = vector.load %arg1[%c0, %c0_0] : memref<8x16xf32, #tpu.memory_space<vmem>>, vector<8x16xf32>
    %c0_1 = arith.constant 0 : index
    %c0_2 = arith.constant 0 : index
    %1 = vector.load %arg5[%c0_1, %c0_2] : memref<3x128xf32, #tpu.memory_space<vmem>>, vector<3x128xf32>
    %c0_3 = arith.constant 0 : index
    %c0_4 = arith.constant 0 : index
    %2 = vector.load %arg2[%c0_3, %c0_4] : memref<16x128xf32, #tpu.memory_space<vmem>>, vector<16x128xf32>
    %cst = arith.constant dense<0.000000e+00> : vector<8x128xf32>
    %3 = tpu.matmul %0, %2, %cst {dimension_numbers = #tpu.dot_dimension_numbers<[1], [0], [0], [1], [0, 0, 1, 1], [], []>} : vector<8x16xf32>, vector<16x128xf32>, vector<8x128xf32> -> vector<8x128xf32>
    %4 = vector.extract_strided_slice %1 {offsets = [0, 0], sizes = [1, 128], strides = [1, 1]} : vector<3x128xf32> to vector<1x128xf32>
    %5 = vector.broadcast %4 : vector<1x128xf32> to vector<8x128xf32>
    %6 = arith.addf %3, %5 : vector<8x128xf32>
    %cst_5 = arith.constant 0.000000e+00 : f32
    %7 = vector.broadcast %cst_5 : f32 to vector<8x128xf32>
    %8 = arith.maximumf %6, %7 : vector<8x128xf32>
    %c0_6 = arith.constant 0 : index
    %c0_7 = arith.constant 0 : index
    %c0_8 = arith.constant 0 : index
    %9 = vector.load %arg3[%c0_6, %c0_7, %c0_8] : memref<2x128x128xf32, #tpu.memory_space<vmem>>, vector<1x128x128xf32>
    %10 = vector.shape_cast %9 : vector<1x128x128xf32> to vector<128x128xf32>
    %cst_9 = arith.constant dense<0.000000e+00> : vector<8x128xf32>
    %11 = tpu.matmul %8, %10, %cst_9 {dimension_numbers = #tpu.dot_dimension_numbers<[1], [0], [0], [1], [0, 0, 1, 1], [], []>} : vector<8x128xf32>, vector<128x128xf32>, vector<8x128xf32> -> vector<8x128xf32>
    %12 = vector.extract_strided_slice %1 {offsets = [1, 0], sizes = [1, 128], strides = [1, 1]} : vector<3x128xf32> to vector<1x128xf32>
    %13 = vector.broadcast %12 : vector<1x128xf32> to vector<8x128xf32>
    %14 = arith.addf %11, %13 : vector<8x128xf32>
    %cst_10 = arith.constant 0.000000e+00 : f32
    %15 = vector.broadcast %cst_10 : f32 to vector<8x128xf32>
    %16 = arith.maximumf %14, %15 : vector<8x128xf32>
    %c1 = arith.constant 1 : index
    %c0_11 = arith.constant 0 : index
    %c0_12 = arith.constant 0 : index
    %17 = vector.load %arg3[%c1, %c0_11, %c0_12] : memref<2x128x128xf32, #tpu.memory_space<vmem>>, vector<1x128x128xf32>
    %18 = vector.shape_cast %17 : vector<1x128x128xf32> to vector<128x128xf32>
    %cst_13 = arith.constant dense<0.000000e+00> : vector<8x128xf32>
    %19 = tpu.matmul %16, %18, %cst_13 {dimension_numbers = #tpu.dot_dimension_numbers<[1], [0], [0], [1], [0, 0, 1, 1], [], []>} : vector<8x128xf32>, vector<128x128xf32>, vector<8x128xf32> -> vector<8x128xf32>
    %20 = vector.extract_strided_slice %1 {offsets = [2, 0], sizes = [1, 128], strides = [1, 1]} : vector<3x128xf32> to vector<1x128xf32>
    %21 = vector.broadcast %20 : vector<1x128xf32> to vector<8x128xf32>
    %22 = arith.addf %19, %21 : vector<8x128xf32>
    %cst_14 = arith.constant 0.000000e+00 : f32
    %23 = vector.broadcast %cst_14 : f32 to vector<8x128xf32>
    %24 = arith.maximumf %22, %23 : vector<8x128xf32>
    %c0_15 = arith.constant 0 : index
    %c0_16 = arith.constant 0 : index
    %25 = vector.load %arg4[%c0_15, %c0_16] : memref<128x8xf32, #tpu.memory_space<vmem>>, vector<128x8xf32>
    %cst_17 = arith.constant dense<0.000000e+00> : vector<8x8xf32>
    %26 = tpu.matmul %24, %25, %cst_17 {dimension_numbers = #tpu.dot_dimension_numbers<[1], [0], [0], [1], [0, 0, 1, 1], [], []>} : vector<8x128xf32>, vector<128x8xf32>, vector<8x8xf32> -> vector<8x8xf32>
    %c0_18 = arith.constant 0 : index
    %c0_19 = arith.constant 0 : index
    %27 = vector.load %arg6[%c0_18, %c0_19] : memref<1x8xf32, #tpu.memory_space<vmem>>, vector<1x8xf32>
    %28 = vector.broadcast %27 : vector<1x8xf32> to vector<8x8xf32>
    %29 = arith.addf %26, %28 : vector<8x8xf32>
    %c0_20 = arith.constant 0 : index
    %c0_21 = arith.constant 0 : index
    %30 = vector.load %arg7[%c0_20, %c0_21] : memref<8x8xf32, #tpu.memory_space<vmem>>, vector<8x8xf32>
    tpu.vector_store %arg7[%c0_20, %c0_21], %29 {strides = array<i32>} : memref<8x8xf32, #tpu.memory_space<vmem>>, vector<8x8xf32>,
    return
  }
  func.func @transform_0(%arg0: i32) -> (i32, i32) {
    %c0_i32 = arith.constant 0 : i32
    %c0_i32_0 = arith.constant 0 : i32
    return %arg0, %c0_i32 : i32, i32
  }
  func.func @transform_1(%arg0: i32) -> (i32, i32) {
    %c0_i32 = arith.constant 0 : i32
    %c0_i32_0 = arith.constant 0 : i32
    %c0_i32_1 = arith.constant 0 : i32
    return %c0_i32, %c0_i32_0 : i32, i32
  }
  func.func @transform_2(%arg0: i32) -> (i32, i32, i32) {
    %c0_i32 = arith.constant 0 : i32
    %c0_i32_0 = arith.constant 0 : i32
    %c0_i32_1 = arith.constant 0 : i32
    %c0_i32_2 = arith.constant 0 : i32
    return %c0_i32, %c0_i32_0, %c0_i32_1 : i32, i32, i32
  }
  func.func @transform_3(%arg0: i32) -> (i32, i32) {
    %c0_i32 = arith.constant 0 : i32
    %c0_i32_0 = arith.constant 0 : i32
    %c0_i32_1 = arith.constant 0 : i32
    return %c0_i32, %c0_i32_0 : i32, i32
  }
  func.func @transform_4(%arg0: i32) -> (i32, i32) {
    %c0_i32 = arith.constant 0 : i32
    %c0_i32_0 = arith.constant 0 : i32
    %c0_i32_1 = arith.constant 0 : i32
    return %c0_i32, %c0_i32_0 : i32, i32
  }
  func.func @transform_5(%arg0: i32) -> (i32, i32) {
    %c0_i32 = arith.constant 0 : i32
    %c0_i32_0 = arith.constant 0 : i32
    %c0_i32_1 = arith.constant 0 : i32
    return %c0_i32, %c0_i32_0 : i32, i32
  }
  func.func @transform_6(%arg0: i32) -> (i32, i32) {
    %c0_i32 = arith.constant 0 : i32
    %c0_i32_0 = arith.constant 0 : i32
    return %arg0, %c0_i32 : i32, i32
  }
}

</mosaic_0001>

<llo_original>
// kernel: tpu_custom_call.1
$region0: #{tpu_custom_call.1}
  #allocation0 [shape = 'u32[]', space=smem, size = 0x4, offset = 0x4, fixed_abs, tag = 'smem constant byte address 0x4 - core index']
  #allocation1 [shape = 'u32[144,128]{1,0:T(1,128)}', space=vmem, size = 0x12000, scoped, tag = 'internal scratch']
  %s0 = inlined_call_operand.vmem [shape: f32[8,16], index: 0, kind: input, shape index: {}]
  %s1 = inlined_call_operand.vmem [shape: f32[16,128], index: 1, kind: input, shape index: {}]
  %s2 = inlined_call_operand.hbm [shape: f32[2,128,128], index: 2, kind: input, shape index: {}]
  %s3 = inlined_call_operand.vmem [shape: f32[128,8], index: 3, kind: input, shape index: {}]
  %s4 = inlined_call_operand.vmem [shape: f32[3,128], index: 4, kind: input, shape index: {}]
  %s5 = inlined_call_operand.vmem [shape: f32[1,8], index: 5, kind: input, shape index: {}]
  %s6 = inlined_call_operand.hbm [shape: f32[8,8], index: 6, kind: output, shape index: {}]
  %s7 = sld [smem:[#allocation0]]
  $region38: #{tpu_custom_call.1} parent=0
    _
  %s9 = ssub.s32 1, %s7
  %s10 = scalar_select 0, %s9, %s7
  $region1: #{tpu_custom_call.1} parent=0
    #allocation2 [shape = 'u8[131072]{0}', space=vmem, size = 0x20000, scoped, tag = 'input window, operand 2, single buffered']
    #allocation3 [shape = 's32[1]{0}', space=sflag, size = 0x4, scoped, tag = 'scoped memory for tpu_custom_call.1']
    #allocation4 [shape = 's32[1]{0}', space=sflag, size = 0x4, scoped, tag = 'scoped memory for tpu_custom_call.1']
    #allocation5 [shape = 'u8[4096]{0}', space=vmem, size = 0x1000, scoped, tag = 'output window, operand 0, single buffered']
    %11 = vsyncpa [#allocation3], 0
    %12 = vsyncpa [#allocation4], 0
    // Predicated region
    $region2: #{tpu_custom_call.1} parent=1 // pred_check
      _
    $region3: #{tpu_custom_call.1} parent=1 // pred_check_branch
      %14 = sbr.rel (0) target = $region5
    $region4: #{tpu_custom_call.1} parent=1 // pred_region
      _
    $region5: #{tpu_custom_call.1} parent=1 // pred_fallthru
      _
    // Predicated region
    $region6: #{tpu_custom_call.1} parent=1 // pred_check
      _
    $region7: #{tpu_custom_call.1} parent=1 // pred_check_branch
      %16 = sbr.rel (0) target = $region9
    $region8: #{tpu_custom_call.1} parent=1 // pred_region
      _
    $region9: #{tpu_custom_call.1} parent=1 // pred_fallthru
      _
    // Predicated region
    $region10: #{tpu_custom_call.1} parent=1 // pred_check
      _
    $region11: #{tpu_custom_call.1} parent=1 // pred_check_branch
      %18 = sbr.rel (0) target = $region13
    $region12: #{tpu_custom_call.1} parent=1 // pred_region
      %s20 = ssub.s32 4096, 4096
      %21 = vsyncadd [#allocation3], %s20
      %s22 = sshll.u32 [#allocation2], 4
      %s23 = int_to_ptr.vmem [resolvable:$true] %s22
      %28 = dma.hbm_to_vmem [thread:$0]  %s2, 4096, %s23, [#allocation3], 128, 128, 8
    $region13: #{tpu_custom_call.1} parent=1 // pred_fallthru
      _
    // Predicated region
    $region14: #{tpu_custom_call.1} parent=1 // pred_check
      _
    $region15: #{tpu_custom_call.1} parent=1 // pred_check_branch
      %30 = sbr.rel (0) target = $region17
    $region16: #{tpu_custom_call.1} parent=1 // pred_region
      _
    $region17: #{tpu_custom_call.1} parent=1 // pred_fallthru
      _
    // Predicated region
    $region18: #{tpu_custom_call.1} parent=1 // pred_check
      _
    $region19: #{tpu_custom_call.1} parent=1 // pred_check_branch
      %32 = sbr.rel (0) target = $region21
    $region20: #{tpu_custom_call.1} parent=1 // pred_region
      _
    $region21: #{tpu_custom_call.1} parent=1 // pred_fallthru
      _
    // Predicated region
    $region22: #{tpu_custom_call.1} parent=1 // pred_check
      _
    $region23: #{tpu_custom_call.1} parent=1 // pred_check_branch
      %34 = sbr.rel (0) target = $region25
    $region24: #{tpu_custom_call.1} parent=1 // pred_region
      _
    $region25: #{tpu_custom_call.1} parent=1 // pred_fallthru
      _
    // Predicated region
    $region26: #{tpu_custom_call.1} parent=1 // pred_check
      _
    $region27: #{tpu_custom_call.1} parent=1 // pred_check_branch
      %36 = sbr.rel (0) target = $region29
    $region28: #{tpu_custom_call.1} parent=1 // pred_region
      %37 = dma.done [#allocation3], 4096
    $region29: #{tpu_custom_call.1} parent=1 // pred_fallthru
      _
    %v38 = vld [vmem:[%s0] sm:$0xff]
    %v39 = vld [vmem:[%s4] sm:$0x7]
    %v40 = vld [vmem:[%s1] sm:$0xff]
    %v41 = vld [vmem:[%s1 + $0x8] sm:$0xff]
    %v42 = vlaneseq
    %v43 = vshrl.u32 %v42, 7
    %v44 = vsub.s32 0, %v43
    %v45 = vrot.slane %v39, %v44
    %vm46 = vcmask 130048
    %v48 = vsel %vm46, %v38, 0
    %50 = vmatprep.subr.mxu0 0.0
    %51 = vmatpush1.msra.mxu0 %v40
    %52 = vmatprep.subr.mxu0 0.0
    %53 = vmatpush1.msra.mxu0 %v41
    %54 = vmatprep.subr.mxu0 0.0
    %55 = vmatpush1.msra.mxu0 0.0
    %56 = vmatprep.subr.mxu0 0.0
    %57 = vmatpush1.msra.mxu0 0.0
    %58 = vmatprep.subr.mxu0 0.0
    %59 = vmatpush1.msra.mxu0 0.0
    %60 = vmatprep.subr.mxu0 0.0
    %61 = vmatpush1.msra.mxu0 0.0
    %62 = vmatprep.subr.mxu0 0.0
    %63 = vmatpush1.msra.mxu0 0.0
    %64 = vmatprep.subr.mxu0 0.0
    %65 = vmatpush1.msra.mxu0 0.0
    %66 = vmatprep.subr.mxu0 0.0
    %67 = vmatpush1.msra.mxu0 0.0
    %68 = vmatprep.subr.mxu0 0.0
    %69 = vmatpush1.msra.mxu0 0.0
    %70 = vmatprep.subr.mxu0 0.0
    %71 = vmatpush1.msra.mxu0 0.0
    %72 = vmatprep.subr.mxu0 0.0
    %73 = vmatpush1.msra.mxu0 0.0
    %74 = vmatprep.subr.mxu0 0.0
    %75 = vmatpush1.msra.mxu0 0.0
    %76 = vmatprep.subr.mxu0 0.0
    %77 = vmatpush1.msra.mxu0 0.0
    %78 = vmatprep.subr.mxu0 0.0
    %79 = vmatpush1.msra.mxu0 0.0
    %80 = vmatprep.subr.mxu0 0.0
    %81 = vmatpush1.msra.mxu0 0.0
    %82 = vmatprep.subr.mxu0 0.0
    %83 = vmatpush1.msra.mxu0 0.0
    %84 = vmatprep.subr.mxu0 0.0
    %85 = vmatpush1.msra.mxu0 0.0
    %86 = vmatprep.subr.mxu0 0.0
    %87 = vmatpush1.msra.mxu0 0.0
    %88 = vmatprep.subr.mxu0 0.0
    %89 = vmatpush1.msra.mxu0 0.0
    %90 = vmatprep.subr.mxu0 0.0
    %91 = vmatpush1.msra.mxu0 0.0
    %92 = vmatprep.subr.mxu0 0.0
    %93 = vmatpush1.msra.mxu0 0.0
    %94 = vmatprep.subr.mxu0 0.0
    %95 = vmatpush1.msra.mxu0 0.0
    %96 = vmatprep.subr.mxu0 0.0
    %97 = vmatpush1.msra.mxu0 0.0
    %98 = vmatprep.subr.mxu0 0.0
    %99 = vmatpush1.msra.mxu0 0.0
    %100 = vmatprep.subr.mxu0 0.0
    %101 = vmatpush1.msra.mxu0 0.0
    %102 = vmatprep.subr.mxu0 0.0
    %103 = vmatpush1.msra.mxu0 0.0
    %104 = vmatprep.subr.mxu0 0.0
    %105 = vmatpush1.msra.mxu0 0.0
    %106 = vmatprep.subr.mxu0 0.0
    %107 = vmatpush1.msra.mxu0 0.0
    %108 = vmatprep.subr.mxu0 0.0
    %109 = vmatpush1.msra.mxu0 0.0
    %110 = vmatprep.subr.mxu0 0.0
    %111 = vmatpush1.msra.mxu0 0.0
    %112 = vmatprep.subr.mxu0 0.0
    %113 = vmatpush1.msra.mxu0 0.0
    %114 = vmatprep.mubr.f32.mxu0 0.0
    %115 = vmatmul.mubr.f32.gmra.mrb[0].mxu0 %v48
    %v116 = vpop.f32.mrb[0].mxu0
    %v117 = vadd.f32 %v45, %v116
    %v118 = vpop.f32.mrb[0].mxu0
    %119 = vdwg.mxu0
    %v120 = vmax.f32 %v117, 0.0
    %v121 = vld [vmem:[#allocation2] sm:$0xff]
    %v122 = vld [vmem:[#allocation2 + $0x8] sm:$0xff]
    %v123 = vld [vmem:[#allocation2 + $0x10] sm:$0xff]
    %v124 = vld [vmem:[#allocation2 + $0x18] sm:$0xff]
    %v125 = vld [vmem:[#allocation2 + $0x20] sm:$0xff]
    %v126 = vld [vmem:[#allocation2 + $0x28] sm:$0xff]
    %v127 = vld [vmem:[#allocation2 + $0x30] sm:$0xff]
    %v128 = vld [vmem:[#allocation2 + $0x38] sm:$0xff]
    %v129 = vld [vmem:[#allocation2 + $0x40] sm:$0xff]
    %v130 = vld [vmem:[#allocation2 + $0x48] sm:$0xff]
    %v131 = vld [vmem:[#allocation2 + $0x50] sm:$0xff]
    %v132 = vld [vmem:[#allocation2 + $0x58] sm:$0xff]
    %v133 = vld [vmem:[#allocation2 + $0x60] sm:$0xff]
    %v134 = vld [vmem:[#allocation2 + $0x68] sm:$0xff]
    %v135 = vld [vmem:[#allocation2 + $0x70] sm:$0xff]
    %v136 = vld [vmem:[#allocation2 + $0x78] sm:$0xff]
    %v137 = vlaneseq
    %v138 = vshrl.u32 %v137, 7
    %v139 = vsub.s32 1, %v138
    %v140 = vrot.slane %v39, %v139
    %141 = vmatprep.subr.mxu0 0.0
    %142 = vmatpush1.msra.mxu0 %v121
    %143 = vmatprep.subr.mxu0 0.0
    %144 = vmatpush1.msra.mxu0 %v122
    %145 = vmatprep.subr.mxu0 0.0
    %146 = vmatpush1.msra.mxu0 %v123
    %147 = vmatprep.subr.mxu0 0.0
    %148 = vmatpush1.msra.mxu0 %v124
    %149 = vmatprep.subr.mxu0 0.0
    %150 = vmatpush1.msra.mxu0 %v125
    %151 = vmatprep.subr.mxu0 0.0
    %152 = vmatpush1.msra.mxu0 %v126
    %153 = vmatprep.subr.mxu0 0.0
    %154 = vmatpush1.msra.mxu0 %v127
    %155 = vmatprep.subr.mxu0 0.0
    %156 = vmatpush1.msra.mxu0 %v128
    %157 = vmatprep.subr.mxu0 0.0
    %158 = vmatpush1.msra.mxu0 %v129
    %159 = vmatprep.subr.mxu0 0.0
    %160 = vmatpush1.msra.mxu0 %v130
    %161 = vmatprep.subr.mxu0 0.0
    %162 = vmatpush1.msra.mxu0 %v131
    %163 = vmatprep.subr.mxu0 0.0
    %164 = vmatpush1.msra.mxu0 %v132
    %165 = vmatprep.subr.mxu0 0.0
    %166 = vmatpush1.msra.mxu0 %v133
    %167 = vmatprep.subr.mxu0 0.0
    %168 = vmatpush1.msra.mxu0 %v134
    %169 = vmatprep.subr.mxu0 0.0
    %170 = vmatpush1.msra.mxu0 %v135
    %171 = vmatprep.subr.mxu0 0.0
    %172 = vmatpush1.msra.mxu0 %v136
    %173 = vmatprep.subr.mxu0 0.0
    %174 = vmatpush1.msra.mxu0 0.0
    %175 = vmatprep.subr.mxu0 0.0
    %176 = vmatpush1.msra.mxu0 0.0
    %177 = vmatprep.subr.mxu0 0.0
    %178 = vmatpush1.msra.mxu0 0.0
    %179 = vmatprep.subr.mxu0 0.0
    %180 = vmatpush1.msra.mxu0 0.0
    %181 = vmatprep.subr.mxu0 0.0
    %182 = vmatpush1.msra.mxu0 0.0
    %183 = vmatprep.subr.mxu0 0.0
    %184 = vmatpush1.msra.mxu0 0.0
    %185 = vmatprep.subr.mxu0 0.0
    %186 = vmatpush1.msra.mxu0 0.0
    %187 = vmatprep.subr.mxu0 0.0
    %188 = vmatpush1.msra.mxu0 0.0
    %189 = vmatprep.subr.mxu0 0.0
    %190 = vmatpush1.msra.mxu0 0.0
    %191 = vmatprep.subr.mxu0 0.0
    %192 = vmatpush1.msra.mxu0 0.0
    %193 = vmatprep.subr.mxu0 0.0
    %194 = vmatpush1.msra.mxu0 0.0
    %195 = vmatprep.subr.mxu0 0.0
    %196 = vmatpush1.msra.mxu0 0.0
    %197 = vmatprep.subr.mxu0 0.0
    %198 = vmatpush1.msra.mxu0 0.0
    %199 = vmatprep.subr.mxu0 0.0
    %200 = vmatpush1.msra.mxu0 0.0
    %201 = vmatprep.subr.mxu0 0.0
    %202 = vmatpush1.msra.mxu0 0.0
    %203 = vmatprep.subr.mxu0 0.0
    %204 = vmatpush1.msra.mxu0 0.0
    %205 = vmatprep.mubr.f32.mxu0 0.0
    %206 = vmatmul.mubr.f32.gmra.mrb[0].mxu0 %v120
    %v207 = vpop.f32.mrb[0].mxu0
    %v208 = vadd.f32 %v140, %v207
    %v209 = vpop.f32.mrb[0].mxu0
    %210 = vdwg.mxu0
    %v211 = vmax.f32 %v208, 0.0
    %s212 = scalar_lea.vmem [#allocation2], 128
    %v213 = vld [vmem:[%s212] sm:$0xff]
    %v214 = vld [vmem:[%s212 + $0x8] sm:$0xff]
    %v215 = vld [vmem:[%s212 + $0x10] sm:$0xff]
    %v216 = vld [vmem:[%s212 + $0x18] sm:$0xff]
    %v217 = vld [vmem:[%s212 + $0x20] sm:$0xff]
    %v218 = vld [vmem:[%s212 + $0x28] sm:$0xff]
    %v219 = vld [vmem:[%s212 + $0x30] sm:$0xff]
    %v220 = vld [vmem:[%s212 + $0x38] sm:$0xff]
    %v221 = vld [vmem:[%s212 + $0x40] sm:$0xff]
    %v222 = vld [vmem:[%s212 + $0x48] sm:$0xff]
    %v223 = vld [vmem:[%s212 + $0x50] sm:$0xff]
    %v224 = vld [vmem:[%s212 + $0x58] sm:$0xff]
    %v225 = vld [vmem:[%s212 + $0x60] sm:$0xff]
    %v226 = vld [vmem:[%s212 + $0x68] sm:$0xff]
    %v227 = vld [vmem:[%s212 + $0x70] sm:$0xff]
    %v228 = vld [vmem:[%s212 + $0x78] sm:$0xff]
    %v229 = vlaneseq
    %v230 = vshrl.u32 %v229, 7
    %v231 = vsub.s32 2, %v230
    %v232 = vrot.slane %v39, %v231
    %233 = vmatprep.subr.mxu0 0.0
    %234 = vmatpush1.msra.mxu0 %v213
    %235 = vmatprep.subr.mxu0 0.0
    %236 = vmatpush1.msra.mxu0 %v214
    %237 = vmatprep.subr.mxu0 0.0
    %238 = vmatpush1.msra.mxu0 %v215
    %239 = vmatprep.subr.mxu0 0.0
    %240 = vmatpush1.msra.mxu0 %v216
    %241 = vmatprep.subr.mxu0 0.0
    %242 = vmatpush1.msra.mxu0 %v217
    %243 = vmatprep.subr.mxu0 0.0
    %244 = vmatpush1.msra.mxu0 %v218
    %245 = vmatprep.subr.mxu0 0.0
    %246 = vmatpush1.msra.mxu0 %v219
    %247 = vmatprep.subr.mxu0 0.0
    %248 = vmatpush1.msra.mxu0 %v220
    %249 = vmatprep.subr.mxu0 0.0
    %250 = vmatpush1.msra.mxu0 %v221
    %251 = vmatprep.subr.mxu0 0.0
    %252 = vmatpush1.msra.mxu0 %v222
    %253 = vmatprep.subr.mxu0 0.0
    %254 = vmatpush1.msra.mxu0 %v223
    %255 = vmatprep.subr.mxu0 0.0
    %256 = vmatpush1.msra.mxu0 %v224
    %257 = vmatprep.subr.mxu0 0.0
    %258 = vmatpush1.msra.mxu0 %v225
    %259 = vmatprep.subr.mxu0 0.0
    %260 = vmatpush1.msra.mxu0 %v226
    %261 = vmatprep.subr.mxu0 0.0
    %262 = vmatpush1.msra.mxu0 %v227
    %263 = vmatprep.subr.mxu0 0.0
    %264 = vmatpush1.msra.mxu0 %v228
    %265 = vmatprep.subr.mxu0 0.0
    %266 = vmatpush1.msra.mxu0 0.0
    %267 = vmatprep.subr.mxu0 0.0
    %268 = vmatpush1.msra.mxu0 0.0
    %269 = vmatprep.subr.mxu0 0.0
    %270 = vmatpush1.msra.mxu0 0.0
    %271 = vmatprep.subr.mxu0 0.0
    %272 = vmatpush1.msra.mxu0 0.0
    %273 = vmatprep.subr.mxu0 0.0
    %274 = vmatpush1.msra.mxu0 0.0
    %275 = vmatprep.subr.mxu0 0.0
    %276 = vmatpush1.msra.mxu0 0.0
    %277 = vmatprep.subr.mxu0 0.0
    %278 = vmatpush1.msra.mxu0 0.0
    %279 = vmatprep.subr.mxu0 0.0
    %280 = vmatpush1.msra.mxu0 0.0
    %281 = vmatprep.subr.mxu0 0.0
    %282 = vmatpush1.msra.mxu0 0.0
    %283 = vmatprep.subr.mxu0 0.0
    %284 = vmatpush1.msra.mxu0 0.0
    %285 = vmatprep.subr.mxu0 0.0
    %286 = vmatpush1.msra.mxu0 0.0
    %287 = vmatprep.subr.mxu0 0.0
    %288 = vmatpush1.msra.mxu0 0.0
    %289 = vmatprep.subr.mxu0 0.0
    %290 = vmatpush1.msra.mxu0 0.0
    %291 = vmatprep.subr.mxu0 0.0
    %292 = vmatpush1.msra.mxu0 0.0
    %293 = vmatprep.subr.mxu0 0.0
    %294 = vmatpush1.msra.mxu0 0.0
    %295 = vmatprep.subr.mxu0 0.0
    %296 = vmatpush1.msra.mxu0 0.0
    %297 = vmatprep.mubr.f32.mxu0 0.0
    %298 = vmatmul.mubr.f32.gmra.mrb[0].mxu0 %v211
    %v299 = vpop.f32.mrb[0].mxu0
    %v300 = vadd.f32 %v232, %v299
    %v301 = vpop.f32.mrb[0].mxu0
    %302 = vdwg.mxu0
    %v303 = vmax.f32 %v300, 0.0
    %v304 = vld [vmem:[%s3] sm:$0xff]
    %v305 = vld [vmem:[%s3 + $0x8] sm:$0xff]
    %v306 = vld [vmem:[%s3 + $0x10] sm:$0xff]
    %v307 = vld [vmem:[%s3 + $0x18] sm:$0xff]
    %v308 = vld [vmem:[%s3 + $0x20] sm:$0xff]
    %v309 = vld [vmem:[%s3 + $0x28] sm:$0xff]
    %v310 = vld [vmem:[%s3 + $0x30] sm:$0xff]
    %v311 = vld [vmem:[%s3 + $0x38] sm:$0xff]
    %v312 = vld [vmem:[%s3 + $0x40] sm:$0xff]
    %v313 = vld [vmem:[%s3 + $0x48] sm:$0xff]
    %v314 = vld [vmem:[%s3 + $0x50] sm:$0xff]
    %v315 = vld [vmem:[%s3 + $0x58] sm:$0xff]
    %v316 = vld [vmem:[%s3 + $0x60] sm:$0xff]
    %v317 = vld [vmem:[%s3 + $0x68] sm:$0xff]
    %v318 = vld [vmem:[%s3 + $0x70] sm:$0xff]
    %v319 = vld [vmem:[%s3 + $0x78] sm:$0xff]
    %v320 = vld [vmem:[%s5] sm:$0x1]
    %v322 = vlaneseq
    %v323 = vshrl.u32 %v322, 7
    %v324 = vsub.s32 0, %v323
    %v325 = vrot.slane %v320, %v324
    %327 = vmatprep.subr.mxu0 0.0
    %328 = vmatpush1.msra.mxu0 %v304
    %329 = vmatprep.subr.mxu0 0.0
    %330 = vmatpush1.msra.mxu0 %v305
    %331 = vmatprep.subr.mxu0 0.0
    %332 = vmatpush1.msra.mxu0 %v306
    %333 = vmatprep.subr.mxu0 0.0
    %334 = vmatpush1.msra.mxu0 %v307
    %335 = vmatprep.subr.mxu0 0.0
    %336 = vmatpush1.msra.mxu0 %v308
    %337 = vmatprep.subr.mxu0 0.0
    %338 = vmatpush1.msra.mxu0 %v309
    %339 = vmatprep.subr.mxu0 0.0
    %340 = vmatpush1.msra.mxu0 %v310
    %341 = vmatprep.subr.mxu0 0.0
    %342 = vmatpush1.msra.mxu0 %v311
    %343 = vmatprep.subr.mxu0 0.0
    %344 = vmatpush1.msra.mxu0 %v312
    %345 = vmatprep.subr.mxu0 0.0
    %346 = vmatpush1.msra.mxu0 %v313
    %347 = vmatprep.subr.mxu0 0.0
    %348 = vmatpush1.msra.mxu0 %v314
    %349 = vmatprep.subr.mxu0 0.0
    %350 = vmatpush1.msra.mxu0 %v315
    %351 = vmatprep.subr.mxu0 0.0
    %352 = vmatpush1.msra.mxu0 %v316
    %353 = vmatprep.subr.mxu0 0.0
    %354 = vmatpush1.msra.mxu0 %v317
    %355 = vmatprep.subr.mxu0 0.0
    %356 = vmatpush1.msra.mxu0 %v318
    %357 = vmatprep.subr.mxu0 0.0
    %358 = vmatpush1.msra.mxu0 %v319
    %359 = vmatprep.subr.mxu0 0.0
    %360 = vmatpush1.msra.mxu0 0.0
    %361 = vmatprep.subr.mxu0 0.0
    %362 = vmatpush1.msra.mxu0 0.0
    %363 = vmatprep.subr.mxu0 0.0
    %364 = vmatpush1.msra.mxu0 0.0
    %365 = vmatprep.subr.mxu0 0.0
    %366 = vmatpush1.msra.mxu0 0.0
    %367 = vmatprep.subr.mxu0 0.0
    %368 = vmatpush1.msra.mxu0 0.0
    %369 = vmatprep.subr.mxu0 0.0
    %370 = vmatpush1.msra.mxu0 0.0
    %371 = vmatprep.subr.mxu0 0.0
    %372 = vmatpush1.msra.mxu0 0.0
    %373 = vmatprep.subr.mxu0 0.0
    %374 = vmatpush1.msra.mxu0 0.0
    %375 = vmatprep.subr.mxu0 0.0
    %376 = vmatpush1.msra.mxu0 0.0
    %377 = vmatprep.subr.mxu0 0.0
    %378 = vmatpush1.msra.mxu0 0.0
    %379 = vmatprep.subr.mxu0 0.0
    %380 = vmatpush1.msra.mxu0 0.0
    %381 = vmatprep.subr.mxu0 0.0
    %382 = vmatpush1.msra.mxu0 0.0
    %383 = vmatprep.subr.mxu0 0.0
    %384 = vmatpush1.msra.mxu0 0.0
    %385 = vmatprep.subr.mxu0 0.0
    %386 = vmatpush1.msra.mxu0 0.0
    %387 = vmatprep.subr.mxu0 0.0
    %388 = vmatpush1.msra.mxu0 0.0
    %389 = vmatprep.subr.mxu0 0.0
    %390 = vmatpush1.msra.mxu0 0.0
    %391 = vmatprep.mubr.f32.mxu0 0.0
    %392 = vmatmul.mubr.f32.gmra.mrb[0].mxu0 %v303
    %v393 = vpop.f32.mrb[0].mxu0
    %v394 = vadd.f32 %v325, %v393
    %v395 = vpop.f32.mrb[0].mxu0
    %396 = vdwg.mxu0
    %vm397 = vcmask 64512
    %398 = vst.msk [vmem:[#allocation5] sm:$0xff] %vm397, %v394
    // Predicated region
    $region30: #{tpu_custom_call.1} parent=1 // pred_check
      _
    $region31: #{tpu_custom_call.1} parent=1 // pred_check_branch
      %400 = sbr.rel (0) target = $region33
    $region32: #{tpu_custom_call.1} parent=1 // pred_region
      %s402 = ssub.s32 128, 128
      %403 = vsyncadd [#allocation4], %s402
      %s405 = sshll.u32 [#allocation5], 4
      %s406 = int_to_ptr.vmem [resolvable:$true] %s405
      %408 = dma.vmem_to_hbm [thread:$0]  %s406, 128, %s6, [#allocation4]
    $region33: #{tpu_custom_call.1} parent=1 // pred_fallthru
      _
    // Predicated region
    $region34: #{tpu_custom_call.1} parent=1 // pred_check
      _
    $region35: #{tpu_custom_call.1} parent=1 // pred_check_branch
      %410 = sbr.rel (0) target = $region37
    $region36: #{tpu_custom_call.1} parent=1 // pred_region
      %411 = dma.done [#allocation4], 128
    $region37: #{tpu_custom_call.1} parent=1 // pred_fallthru
      _
    %412 = vsyncpa [#allocation3], 1
    %413 = vsyncpa [#allocation4], 1

</llo_original>
